<compile_context>
chip_gen: v7x
topology: tpu7x:2x2x1
jax: 0.10.0
libtpu: 0.0.40
codegen_flags: <defaults>
</compile_context>

<pallas_src>
import functools

import jax
import jax.numpy as jnp
from jax.experimental import pallas as pl
from jax.experimental.pallas import tpu as pltpu

_HIDDEN = 128


def _round_up(x, m):
    return (x + m - 1) // m * m


def _ae_kernel(x_ref,
               w1_ref, b1_ref,
               w23_ref, b23_ref,
               w4_ref, b4_ref,
               o_ref):
    # encoder layer 1 + ReLU.  x arrives as f32 straight from HBM; the bf16
    # cast happens here (cheap VPU op hidden under the matmul) instead of as a
    # separate XLA pass in the wrapper.
    x = x_ref[...].astype(w1_ref.dtype)
    h1 = jnp.dot(x, w1_ref[...], preferred_element_type=jnp.float32)
    h1 = jnp.maximum(h1 + b1_ref[...], 0.0)

    # fused (encoder layer 2 -> decoder layer 1): no nonlinearity between
    # them, so a single pre-fused 128x128 weight is mathematically equivalent
    # and removes the lane-sparse latent-dim path entirely.
    h2 = jnp.dot(h1.astype(w23_ref.dtype), w23_ref[...],
                 preferred_element_type=jnp.float32)
    h2 = jnp.maximum(h2 + b23_ref[...], 0.0)

    # decoder layer 2 + Tanh (epilogue in f32, store in o_ref.dtype)
    y = jnp.dot(h2.astype(w4_ref.dtype), w4_ref[...],
                preferred_element_type=jnp.float32)
    o_ref[...] = jnp.tanh(y + b4_ref[...]).astype(o_ref.dtype)


def prepare_params(params, compute_dtype=jnp.bfloat16):
    """One-time weight prep (hoisted out of the forward call):
       * algebraically fuse the two activation-free middle linears,
       * cast matmul weights to the MXU compute dtype (bf16 by default),
       * keep biases in f32 (bias add / ReLU / tanh epilogue stays f32)."""
    w23 = jnp.dot(params["w2"], params["w3"], preferred_element_type=jnp.float32)
    b23 = jnp.dot(params["b2"], params["w3"],
                  preferred_element_type=jnp.float32) + params["b3"]
    return {
        "w1": params["w1"].astype(compute_dtype),
        "b1": params["b1"].astype(jnp.float32),
        "w23": w23.astype(compute_dtype),
        "b23": b23.astype(jnp.float32),
        "w4": params["w4"].astype(compute_dtype),
        "b4": params["b4"].astype(jnp.float32),
    }


@functools.partial(jax.jit, static_argnames=("block_b", "out_dtype"))
def autoencoder_forward(x, prep, *, block_b=512, out_dtype=jnp.bfloat16):
    """x: (B, input_dim) float32. prep: output of prepare_params()."""
    B, input_dim = x.shape
    assert prep["w1"].shape == (input_dim, _HIDDEN)

    # Batch tile: as large as allowed (amortize grid-step overhead, keep the
    # MXU M dimension big), but guarantee >= 2 grid steps so both v7x
    # TensorCores get work, and round to 16 rows (bf16 sublane packing).
    bb = max(16, min(block_b, _round_up(pl.cdiv(B, 2), 16)))
    grid = (pl.cdiv(B, bb),)

    def rep(arr):
        nd = arr.ndim
        return pl.BlockSpec(arr.shape, lambda i, _nd=nd: (0,) * _nd)

    w_itemsize = jnp.dtype(prep["w1"].dtype).itemsize
    o_itemsize = jnp.dtype(out_dtype).itemsize
    w_elems = input_dim * _HIDDEN + _HIDDEN * _HIDDEN + _HIDDEN * input_dim
    b_elems = _HIDDEN + _HIDDEN + input_dim

    # VMEM budget: double-buffered x / out tiles + double-buffered weights +
    # f32 intermediates, plus headroom; capped at 48 MiB (v7x has 64 MiB/TC).
    x_tile_bytes = bb * input_dim * jnp.dtype(x.dtype).itemsize
    o_tile_bytes = bb * input_dim * o_itemsize
    needed = (2 * (x_tile_bytes + o_tile_bytes)
              + 2 * (w_elems * w_itemsize + b_elems * 4)
              + 3 * bb * _HIDDEN * 4)
    vmem_limit = int(min(48 * 1024 * 1024,
                         max(needed + 4 * 1024 * 1024, 8 * 1024 * 1024)))

    flops = 2 * B * (input_dim * _HIDDEN + _HIDDEN * _HIDDEN + _HIDDEN * input_dim)
    bytes_accessed = (
        B * input_dim * jnp.dtype(x.dtype).itemsize   # x (read once, f32)
        + w_elems * w_itemsize                        # weights (bf16)
        + b_elems * 4                                 # biases (f32)
        + B * input_dim * o_itemsize                  # output (bf16)
    )

    out = pl.pallas_call(
        _ae_kernel,
        out_shape=jax.ShapeDtypeStruct((B, input_dim), out_dtype),
        grid_spec=pl.GridSpec(
            grid=grid,
            in_specs=[
                pl.BlockSpec((bb, input_dim), lambda i: (i, 0)),   # x tile (f32)
                rep(prep["w1"]), rep(prep["b1"]),
                rep(prep["w23"]), rep(prep["b23"]),
                rep(prep["w4"]), rep(prep["b4"]),
            ],
            out_specs=pl.BlockSpec((bb, input_dim), lambda i: (i, 0)),
        ),
        compiler_params=pltpu.CompilerParams(
            dimension_semantics=("parallel",),
            vmem_limit_bytes=vmem_limit,
        ),
        cost_estimate=pl.CostEstimate(
            flops=flops, transcendentals=B * input_dim,
            bytes_accessed=bytes_accessed),
    )(x, prep["w1"], prep["b1"], prep["w23"], prep["b23"],
      prep["w4"], prep["b4"])

    return out


def init_params(key, input_dim, latent_dim, hidden=_HIDDEN):
    """Deterministic synthetic init (PyTorch-style uniform bounds)."""
    ks = jax.random.split(key, 8)

    def linear(kw, kb, fan_in, fan_out):
        bound = 1.0 / jnp.sqrt(fan_in)
        w = jax.random.uniform(kw, (fan_in, fan_out), jnp.float32, -bound, bound)
        b = jax.random.uniform(kb, (1, fan_out), jnp.float32, -bound, bound)
        return w, b

    w1, b1 = linear(ks[0], ks[1], input_dim, hidden)
    w2, b2 = linear(ks[2], ks[3], hidden, latent_dim)
    w3, b3 = linear(ks[4], ks[5], latent_dim, hidden)
    w4, b4 = linear(ks[6], ks[7], hidden, input_dim)
    return {"w1": w1, "b1": b1, "w2": w2, "b2": b2,
            "w3": w3, "b3": b3, "w4": w4, "b4": b4}


def reference_forward_f32(x, p):
    """Pure-f32, unfused math == the original PyTorch module."""
    h = jnp.maximum(x @ p["w1"] + p["b1"], 0.0)
    z = h @ p["w2"] + p["b2"]
    h = jnp.maximum(z @ p["w3"] + p["b3"], 0.0)
    return jnp.tanh(h @ p["w4"] + p["b4"])


def reference_forward_matched(x, p, compute_dtype):
    """Mirrors the kernel's numerics (fused middle linears, low-precision MXU
    inputs, f32 accumulation / epilogue)."""
    cd = compute_dtype
    w23 = jnp.dot(p["w2"], p["w3"], preferred_element_type=jnp.float32)
    b23 = jnp.dot(p["b2"], p["w3"], preferred_element_type=jnp.float32) + p["b3"]
    h1 = jnp.maximum(
        jnp.dot(x.astype(cd), p["w1"].astype(cd),
                preferred_element_type=jnp.float32) + p["b1"], 0.0)
    h2 = jnp.maximum(
        jnp.dot(h1.astype(cd), w23.astype(cd),
                preferred_element_type=jnp.float32) + b23, 0.0)
    y = jnp.dot(h2.astype(cd), p["w4"].astype(cd),
                preferred_element_type=jnp.float32) + p["b4"]
    return jnp.tanh(y)


if __name__ == "__main__":
    key = jax.random.PRNGKey(0)
    k_x, k_p = jax.random.split(key)

    batch = 64
    input_dim = 32
    latent_dim = 16

    x = jax.random.normal(k_x, (batch, input_dim), jnp.float32)
    params = init_params(k_p, input_dim, latent_dim)

    prep = prepare_params(params)                       # one-time weight prep
    out = autoencoder_forward(x, prep)                  # bf16 out by default
    out = jax.block_until_ready(out)
    assert out.shape == (batch, input_dim)

    out_f32 = out.astype(jnp.float32)

    # (a) tight check against a reference that mirrors the kernel numerics
    #     (extra slack only for the bf16 output cast, values in [-1, 1])
    ref_m = reference_forward_matched(x, params, jnp.bfloat16)
    assert jnp.allclose(out_f32, ref_m, atol=1e-2, rtol=1e-2), "mismatch vs matched ref"

    # (b) module-semantics check against the pure-f32 PyTorch math
    ref_f = reference_forward_f32(x, params)
    assert jnp.allclose(out_f32, ref_f, atol=5e-2, rtol=5e-2), "mismatch vs f32 ref"

    print("KERNEL_OK")
</pallas_src>

<mosaic_0001>
module attributes {stable_mosaic.version = 11 : i64} {
  func.func @_ae_kernel(%arg0: i32, %arg1: memref<32x32xf32, #tpu.memory_space<vmem>>, %arg2: memref<32x128xbf16, #tpu.memory_space<vmem>>, %arg3: memref<1x128xf32, #tpu.memory_space<vmem>>, %arg4: memref<128x128xbf16, #tpu.memory_space<vmem>>, %arg5: memref<1x128xf32, #tpu.memory_space<vmem>>, %arg6: memref<128x32xbf16, #tpu.memory_space<vmem>>, %arg7: memref<1x32xf32, #tpu.memory_space<vmem>>, %arg8: memref<32x32xbf16, #tpu.memory_space<vmem>>) attributes {dimension_semantics = [#tpu.dimension_semantics<parallel>], iteration_bounds = array<i64: 2>, scalar_prefetch = 0 : i64, scratch_operands = 0 : i64, tpu.core_type = #tpu.core_type<tc>, window_params = [{transform_indices = @transform_0, window_bounds = array<i64: 32, 32>}, {pipeline_mode = #tpu.pipeline_mode<synchronous>, transform_indices = @transform_1, window_bounds = array<i64: 32, 128>}, {pipeline_mode = #tpu.pipeline_mode<synchronous>, transform_indices = @transform_2, window_bounds = array<i64: 1, 128>}, {pipeline_mode = #tpu.pipeline_mode<synchronous>, transform_indices = @transform_3, window_bounds = array<i64: 128, 128>}, {pipeline_mode = #tpu.pipeline_mode<synchronous>, transform_indices = @transform_4, window_bounds = array<i64: 1, 128>}, {pipeline_mode = #tpu.pipeline_mode<synchronous>, transform_indices = @transform_5, window_bounds = array<i64: 128, 32>}, {pipeline_mode = #tpu.pipeline_mode<synchronous>, transform_indices = @transform_6, window_bounds = array<i64: 1, 32>}, {transform_indices = @transform_7, window_bounds = array<i64: 32, 32>}]} {
    %c0 = arith.constant 0 : index
    %c0_0 = arith.constant 0 : index
    %0 = vector.load %arg1[%c0, %c0_0] : memref<32x32xf32, #tpu.memory_space<vmem>>, vector<32x32xf32>
    %1 = arith.truncf %0 : vector<32x32xf32> to vector<32x32xbf16>
    %c0_1 = arith.constant 0 : index
    %c0_2 = arith.constant 0 : index
    %2 = vector.load %arg2[%c0_1, %c0_2] : memref<32x128xbf16, #tpu.memory_space<vmem>>, vector<32x128xbf16>
    %cst = arith.constant dense<0.000000e+00> : vector<32x128xf32>
    %3 = tpu.matmul %1, %2, %cst {dimension_numbers = #tpu.dot_dimension_numbers<[1], [0], [0], [1], [0, 0, 1, 1], [], []>} : vector<32x32xbf16>, vector<32x128xbf16>, vector<32x128xf32> -> vector<32x128xf32>
    %c0_3 = arith.constant 0 : index
    %c0_4 = arith.constant 0 : index
    %4 = vector.load %arg3[%c0_3, %c0_4] : memref<1x128xf32, #tpu.memory_space<vmem>>, vector<1x128xf32>
    %5 = vector.broadcast %4 : vector<1x128xf32> to vector<32x128xf32>
    %6 = arith.addf %3, %5 : vector<32x128xf32>
    %cst_5 = arith.constant 0.000000e+00 : f32
    %7 = vector.broadcast %cst_5 : f32 to vector<32x128xf32>
    %8 = arith.maximumf %6, %7 : vector<32x128xf32>
    %9 = arith.truncf %8 : vector<32x128xf32> to vector<32x128xbf16>
    %c0_6 = arith.constant 0 : index
    %c0_7 = arith.constant 0 : index
    %10 = vector.load %arg4[%c0_6, %c0_7] : memref<128x128xbf16, #tpu.memory_space<vmem>>, vector<128x128xbf16>
    %cst_8 = arith.constant dense<0.000000e+00> : vector<32x128xf32>
    %11 = tpu.matmul %9, %10, %cst_8 {dimension_numbers = #tpu.dot_dimension_numbers<[1], [0], [0], [1], [0, 0, 1, 1], [], []>} : vector<32x128xbf16>, vector<128x128xbf16>, vector<32x128xf32> -> vector<32x128xf32>
    %c0_9 = arith.constant 0 : index
    %c0_10 = arith.constant 0 : index
    %12 = vector.load %arg5[%c0_9, %c0_10] : memref<1x128xf32, #tpu.memory_space<vmem>>, vector<1x128xf32>
    %13 = vector.broadcast %12 : vector<1x128xf32> to vector<32x128xf32>
    %14 = arith.addf %11, %13 : vector<32x128xf32>
    %cst_11 = arith.constant 0.000000e+00 : f32
    %15 = vector.broadcast %cst_11 : f32 to vector<32x128xf32>
    %16 = arith.maximumf %14, %15 : vector<32x128xf32>
    %17 = arith.truncf %16 : vector<32x128xf32> to vector<32x128xbf16>
    %c0_12 = arith.constant 0 : index
    %c0_13 = arith.constant 0 : index
    %18 = vector.load %arg6[%c0_12, %c0_13] : memref<128x32xbf16, #tpu.memory_space<vmem>>, vector<128x32xbf16>
    %cst_14 = arith.constant dense<0.000000e+00> : vector<32x32xf32>
    %19 = tpu.matmul %17, %18, %cst_14 {dimension_numbers = #tpu.dot_dimension_numbers<[1], [0], [0], [1], [0, 0, 1, 1], [], []>} : vector<32x128xbf16>, vector<128x32xbf16>, vector<32x32xf32> -> vector<32x32xf32>
    %c0_15 = arith.constant 0 : index
    %c0_16 = arith.constant 0 : index
    %20 = vector.load %arg7[%c0_15, %c0_16] : memref<1x32xf32, #tpu.memory_space<vmem>>, vector<1x32xf32>
    %21 = vector.broadcast %20 : vector<1x32xf32> to vector<32x32xf32>
    %22 = arith.addf %19, %21 : vector<32x32xf32>
    %23 = math.tanh %22 : vector<32x32xf32>
    %24 = arith.truncf %23 : vector<32x32xf32> to vector<32x32xbf16>
    %c0_17 = arith.constant 0 : index
    %c0_18 = arith.constant 0 : index
    %25 = vector.load %arg8[%c0_17, %c0_18] : memref<32x32xbf16, #tpu.memory_space<vmem>>, vector<32x32xbf16>
    tpu.vector_store %arg8[%c0_17, %c0_18], %24 {strides = array<i32>} : memref<32x32xbf16, #tpu.memory_space<vmem>>, vector<32x32xbf16>,
    return
  }
  func.func @transform_0(%arg0: i32) -> (i32, i32) {
    %c0_i32 = arith.constant 0 : i32
    %c0_i32_0 = arith.constant 0 : i32
    return %arg0, %c0_i32 : i32, i32
  }
  func.func @transform_1(%arg0: i32) -> (i32, i32) {
    %c0_i32 = arith.constant 0 : i32
    %c0_i32_0 = arith.constant 0 : i32
    %c0_i32_1 = arith.constant 0 : i32
    return %c0_i32, %c0_i32_0 : i32, i32
  }
  func.func @transform_2(%arg0: i32) -> (i32, i32) {
    %c0_i32 = arith.constant 0 : i32
    %c0_i32_0 = arith.constant 0 : i32
    %c0_i32_1 = arith.constant 0 : i32
    return %c0_i32, %c0_i32_0 : i32, i32
  }
  func.func @transform_3(%arg0: i32) -> (i32, i32) {
    %c0_i32 = arith.constant 0 : i32
    %c0_i32_0 = arith.constant 0 : i32
    %c0_i32_1 = arith.constant 0 : i32
    return %c0_i32, %c0_i32_0 : i32, i32
  }
  func.func @transform_4(%arg0: i32) -> (i32, i32) {
    %c0_i32 = arith.constant 0 : i32
    %c0_i32_0 = arith.constant 0 : i32
    %c0_i32_1 = arith.constant 0 : i32
    return %c0_i32, %c0_i32_0 : i32, i32
  }
  func.func @transform_5(%arg0: i32) -> (i32, i32) {
    %c0_i32 = arith.constant 0 : i32
    %c0_i32_0 = arith.constant 0 : i32
    %c0_i32_1 = arith.constant 0 : i32
    return %c0_i32, %c0_i32_0 : i32, i32
  }
  func.func @transform_6(%arg0: i32) -> (i32, i32) {
    %c0_i32 = arith.constant 0 : i32
    %c0_i32_0 = arith.constant 0 : i32
    %c0_i32_1 = arith.constant 0 : i32
    return %c0_i32, %c0_i32_0 : i32, i32
  }
  func.func @transform_7(%arg0: i32) -> (i32, i32) {
    %c0_i32 = arith.constant 0 : i32
    %c0_i32_0 = arith.constant 0 : i32
    return %arg0, %c0_i32 : i32, i32
  }
}

</mosaic_0001>

<llo_original>
// kernel: autoencoder_forward.1
$region0: #{autoencoder_forward.1}
  #allocation0 [shape = 'u32[]', space=smem, size = 0x4, offset = 0x4, fixed_abs, tag = 'smem constant byte address 0x4 - core index']
  #allocation1 [shape = 'u32[144,128]{1,0:T(1,128)}', space=vmem, size = 0x12000, scoped, tag = 'internal scratch']
  %s0 = inlined_call_operand.vmem [shape: f32[64,32], index: 0, kind: input, shape index: {}]
  %s1 = inlined_call_operand.vmem [shape: bf16[32,128], index: 1, kind: input, shape index: {}]
  %s2 = inlined_call_operand.vmem [shape: f32[1,128], index: 2, kind: input, shape index: {}]
  %s3 = inlined_call_operand.vmem [shape: bf16[128,128], index: 3, kind: input, shape index: {}]
  %s4 = inlined_call_operand.vmem [shape: f32[1,128], index: 4, kind: input, shape index: {}]
  %s5 = inlined_call_operand.vmem [shape: bf16[128,32], index: 5, kind: input, shape index: {}]
  %s6 = inlined_call_operand.vmem [shape: f32[1,32], index: 6, kind: input, shape index: {}]
  %s7 = inlined_call_operand.vmem [shape: bf16[64,32], index: 7, kind: output, shape index: {}]
  %s8 = sld [smem:[#allocation0]]
  $region61: #{autoencoder_forward.1} parent=0
    _
  %s10 = ssub.s32 1, %s8
  %s11 = scalar_select 0, %s10, %s8
  loop: start=0, step=1, limit=4
  $region2: #{autoencoder_forward.1} parent=0 // loop_pre_header
    _
  $region3: #{autoencoder_forward.1} parent=0 // loop_header
    %s13 = sphi 0, %s17
    %p14 = scmp.ge.s32.totalorder %s13, 4
    %s23 = sphi 0, %s25
    %s26 = sphi 0, %s23
    %s27 = sphi 0, %s26
    %s43 = sphi 0, %s27
    %s47 = sphi 0, %s47
    %s49 = sphi 0, %s47
    %s50 = sphi 0, %s49
    %s64 = sphi 0, %s50
    %s68 = sphi 0, %s68
    %s70 = sphi 0, %s68
    %s71 = sphi 0, %s70
    %s85 = sphi 0, %s71
    %s89 = sphi 0, %s89
    %s91 = sphi 0, %s89
    %s92 = sphi 0, %s91
    %s106 = sphi 0, %s92
    %s110 = sphi 0, %s110
    %s112 = sphi 0, %s110
    %s113 = sphi 0, %s112
    %s127 = sphi 0, %s113
    %s131 = sphi 0, %s131
    %s133 = sphi 0, %s131
    %s134 = sphi 0, %s133
    %s148 = sphi 0, %s134
    %s152 = sphi 0, %s152
    %s154 = sphi 0, %s152
    %s155 = sphi 0, %s154
    %s169 = sphi 0, %s155
    %s175 = sphi 0, %s177
    %s178 = sphi 0, %s175
    %s179 = sphi 0, %s178
    %s195 = sphi 0, %s179
  $region4: #{autoencoder_forward.1} parent=0 // loop_header_branch
    %16 = sbr.rel (%p14) target = $region8
  $region5: #{autoencoder_forward.1} parent=0 // loop_body
    %s18 = ssub.s32 %s13, 1
    %s19 = ssub.s32 %s13, 2
    %s20 = sadd.s32 %s13, 1
    %s21 = ssub.s32 %s13, %s20
    %p22 = scmp.eq.s32.totalorder %s21, 0
    %s24 = sadd.s32 %s23, 1
    %s25 = scalar_select %p22, %s23, %s24
    %p28 = pneg %p22
    %p29 = scmp.eq.s32.totalorder %s13, 1
    %p30 = por %p28, %p29
    %p31 = scmp.ne.s32.totalorder %s23, %s26
    %p32 = scmp.eq.s32.totalorder %s13, 0
    %p33 = por %p31, %p32
    %p34 = scmp.ne.s32.totalorder %s23, %s26
    %p35 = scmp.eq.s32.totalorder %s18, 1
    %p36 = por %p34, %p35
    %p37 = scmp.ne.s32.totalorder %s26, %s27
    %p38 = scmp.eq.s32.totalorder %s18, 0
    %p39 = por %p37, %p38
    %p40 = scmp.ne.s32.totalorder %s26, %s27
    %p41 = scmp.eq.s32.totalorder %s19, 1
    %p42 = por %p40, %p41
    %p44 = scmp.ne.s32.totalorder %s27, %s43
    %p45 = scmp.eq.s32.totalorder %s19, 0
    %p46 = por %p44, %p45
    %s48 = sadd.s32 %s47, 1
    %p51 = scmp.eq.s32.totalorder %s13, 1
    %p52 = scmp.ne.s32.totalorder %s47, %s49
    %p53 = scmp.eq.s32.totalorder %s13, 0
    %p54 = por %p52, %p53
    %p55 = scmp.ne.s32.totalorder %s47, %s49
    %p56 = scmp.eq.s32.totalorder %s18, 1
    %p57 = por %p55, %p56
    %p58 = scmp.ne.s32.totalorder %s49, %s50
    %p59 = scmp.eq.s32.totalorder %s18, 0
    %p60 = por %p58, %p59
    %p61 = scmp.ne.s32.totalorder %s49, %s50
    %p62 = scmp.eq.s32.totalorder %s19, 1
    %p63 = por %p61, %p62
    %p65 = scmp.ne.s32.totalorder %s50, %s64
    %p66 = scmp.eq.s32.totalorder %s19, 0
    %p67 = por %p65, %p66
    %s69 = sadd.s32 %s68, 1
    %p72 = scmp.eq.s32.totalorder %s13, 1
    %p73 = scmp.ne.s32.totalorder %s68, %s70
    %p74 = scmp.eq.s32.totalorder %s13, 0
    %p75 = por %p73, %p74
    %p76 = scmp.ne.s32.totalorder %s68, %s70
    %p77 = scmp.eq.s32.totalorder %s18, 1
    %p78 = por %p76, %p77
    %p79 = scmp.ne.s32.totalorder %s70, %s71
    %p80 = scmp.eq.s32.totalorder %s18, 0
    %p81 = por %p79, %p80
    %p82 = scmp.ne.s32.totalorder %s70, %s71
    %p83 = scmp.eq.s32.totalorder %s19, 1
    %p84 = por %p82, %p83
    %p86 = scmp.ne.s32.totalorder %s71, %s85
    %p87 = scmp.eq.s32.totalorder %s19, 0
    %p88 = por %p86, %p87
    %s90 = sadd.s32 %s89, 1
    %p93 = scmp.eq.s32.totalorder %s13, 1
    %p94 = scmp.ne.s32.totalorder %s89, %s91
    %p95 = scmp.eq.s32.totalorder %s13, 0
    %p96 = por %p94, %p95
    %p97 = scmp.ne.s32.totalorder %s89, %s91
    %p98 = scmp.eq.s32.totalorder %s18, 1
    %p99 = por %p97, %p98
    %p100 = scmp.ne.s32.totalorder %s91, %s92
    %p101 = scmp.eq.s32.totalorder %s18, 0
    %p102 = por %p100, %p101
    %p103 = scmp.ne.s32.totalorder %s91, %s92
    %p104 = scmp.eq.s32.totalorder %s19, 1
    %p105 = por %p103, %p104
    %p107 = scmp.ne.s32.totalorder %s92, %s106
    %p108 = scmp.eq.s32.totalorder %s19, 0
    %p109 = por %p107, %p108
    %s111 = sadd.s32 %s110, 1
    %p114 = scmp.eq.s32.totalorder %s13, 1
    %p115 = scmp.ne.s32.totalorder %s110, %s112
    %p116 = scmp.eq.s32.totalorder %s13, 0
    %p117 = por %p115, %p116
    %p118 = scmp.ne.s32.totalorder %s110, %s112
    %p119 = scmp.eq.s32.totalorder %s18, 1
    %p120 = por %p118, %p119
    %p121 = scmp.ne.s32.totalorder %s112, %s113
    %p122 = scmp.eq.s32.totalorder %s18, 0
    %p123 = por %p121, %p122
    %p124 = scmp.ne.s32.totalorder %s112, %s113
    %p125 = scmp.eq.s32.totalorder %s19, 1
    %p126 = por %p124, %p125
    %p128 = scmp.ne.s32.totalorder %s113, %s127
    %p129 = scmp.eq.s32.totalorder %s19, 0
    %p130 = por %p128, %p129
    %s132 = sadd.s32 %s131, 1
    %p135 = scmp.eq.s32.totalorder %s13, 1
    %p136 = scmp.ne.s32.totalorder %s131, %s133
    %p137 = scmp.eq.s32.totalorder %s13, 0
    %p138 = por %p136, %p137
    %p139 = scmp.ne.s32.totalorder %s131, %s133
    %p140 = scmp.eq.s32.totalorder %s18, 1
    %p141 = por %p139, %p140
    %p142 = scmp.ne.s32.totalorder %s133, %s134
    %p143 = scmp.eq.s32.totalorder %s18, 0
    %p144 = por %p142, %p143
    %p145 = scmp.ne.s32.totalorder %s133, %s134
    %p146 = scmp.eq.s32.totalorder %s19, 1
    %p147 = por %p145, %p146
    %p149 = scmp.ne.s32.totalorder %s134, %s148
    %p150 = scmp.eq.s32.totalorder %s19, 0
    %p151 = por %p149, %p150
    %s153 = sadd.s32 %s152, 1
    %p156 = scmp.eq.s32.totalorder %s13, 1
    %p157 = scmp.ne.s32.totalorder %s152, %s154
    %p158 = scmp.eq.s32.totalorder %s13, 0
    %p159 = por %p157, %p158
    %p160 = scmp.ne.s32.totalorder %s152, %s154
    %p161 = scmp.eq.s32.totalorder %s18, 1
    %p162 = por %p160, %p161
    %p163 = scmp.ne.s32.totalorder %s154, %s155
    %p164 = scmp.eq.s32.totalorder %s18, 0
    %p165 = por %p163, %p164
    %p166 = scmp.ne.s32.totalorder %s154, %s155
    %p167 = scmp.eq.s32.totalorder %s19, 1
    %p168 = por %p166, %p167
    %p170 = scmp.ne.s32.totalorder %s155, %s169
    %p171 = scmp.eq.s32.totalorder %s19, 0
    %p172 = por %p170, %p171
    %s173 = ssub.s32 %s13, %s20
    %p174 = scmp.eq.s32.totalorder %s173, 0
    %s176 = sadd.s32 %s175, 1
    %s177 = scalar_select %p174, %s175, %s176
    %p180 = pneg %p174
    %p181 = scmp.eq.s32.totalorder %s13, 1
    %p182 = por %p180, %p181
    %p183 = scmp.ne.s32.totalorder %s175, %s178
    %p184 = scmp.eq.s32.totalorder %s13, 0
    %p185 = por %p183, %p184
    %p186 = scmp.ne.s32.totalorder %s175, %s178
    %p187 = scmp.eq.s32.totalorder %s18, 1
    %p188 = por %p186, %p187
    %p189 = scmp.ne.s32.totalorder %s178, %s179
    %p190 = scmp.eq.s32.totalorder %s18, 0
    %p191 = por %p189, %p190
    %p192 = scmp.ne.s32.totalorder %s178, %s179
    %p193 = scmp.eq.s32.totalorder %s19, 1
    %p194 = por %p192, %p193
    %p196 = scmp.ne.s32.totalorder %s179, %s195
    %p197 = scmp.eq.s32.totalorder %s19, 0
    %p198 = por %p196, %p197
    %p199 = scmp.le.s32.totalorder 1, %s13
    %p200 = scmp.lt.s32.totalorder %s13, 3
    %p201 = pnand %p199, %p200
    %p202 = pneg %p201
    // Predicated region
    $region9: #{autoencoder_forward.1} parent=5 // pred_check
      _
    $region10: #{autoencoder_forward.1} parent=5 // pred_check_branch
      %204 = sbr.rel (%p201) target = $region12
    $region11: #{autoencoder_forward.1} parent=5 // pred_region
      %s205 = ssub.s32 %s13, 1
      // Predicated region
      $region13: #{autoencoder_forward.1} parent=11 // pred_check
        %p206 = pneg %p60
      $region14: #{autoencoder_forward.1} parent=11 // pred_check_branch
        %208 = sbr.rel (%p206) target = $region16
      $region15: #{autoencoder_forward.1} parent=11 // pred_region
        _
      $region16: #{autoencoder_forward.1} parent=11 // pred_fallthru
        _
      // Predicated region
      $region17: #{autoencoder_forward.1} parent=11 // pred_check
        %p209 = pneg %p81
      $region18: #{autoencoder_forward.1} parent=11 // pred_check_branch
        %211 = sbr.rel (%p209) target = $region20
      $region19: #{autoencoder_forward.1} parent=11 // pred_region
        _
      $region20: #{autoencoder_forward.1} parent=11 // pred_fallthru
        _
      // Predicated region
      $region21: #{autoencoder_forward.1} parent=11 // pred_check
        %p212 = pneg %p102
      $region22: #{autoencoder_forward.1} parent=11 // pred_check_branch
        %214 = sbr.rel (%p212) target = $region24
      $region23: #{autoencoder_forward.1} parent=11 // pred_region
        _
      $region24: #{autoencoder_forward.1} parent=11 // pred_fallthru
        _
      // Predicated region
      $region25: #{autoencoder_forward.1} parent=11 // pred_check
        %p215 = pneg %p123
      $region26: #{autoencoder_forward.1} parent=11 // pred_check_branch
        %217 = sbr.rel (%p215) target = $region28
      $region27: #{autoencoder_forward.1} parent=11 // pred_region
        _
      $region28: #{autoencoder_forward.1} parent=11 // pred_fallthru
        _
      // Predicated region
      $region29: #{autoencoder_forward.1} parent=11 // pred_check
        %p218 = pneg %p144
      $region30: #{autoencoder_forward.1} parent=11 // pred_check_branch
        %220 = sbr.rel (%p218) target = $region32
      $region31: #{autoencoder_forward.1} parent=11 // pred_region
        _
      $region32: #{autoencoder_forward.1} parent=11 // pred_fallthru
        _
      // Predicated region
      $region33: #{autoencoder_forward.1} parent=11 // pred_check
        %p221 = pneg %p165
      $region34: #{autoencoder_forward.1} parent=11 // pred_check_branch
        %223 = sbr.rel (%p221) target = $region36
      $region35: #{autoencoder_forward.1} parent=11 // pred_region
        _
      $region36: #{autoencoder_forward.1} parent=11 // pred_fallthru
        _
    $region12: #{autoencoder_forward.1} parent=5 // pred_fallthru
      _
    %p224 = scmp.lt.s32.totalorder %s13, 2
    // Predicated region
    $region37: #{autoencoder_forward.1} parent=5 // pred_check
      %p225 = pneg %p224
    $region38: #{autoencoder_forward.1} parent=5 // pred_check_branch
      %227 = sbr.rel (%p225) target = $region40
    $region39: #{autoencoder_forward.1} parent=5 // pred_region
      // Predicated region
      $region41: #{autoencoder_forward.1} parent=39 // pred_check
        %p228 = pneg %p33
      $region42: #{autoencoder_forward.1} parent=39 // pred_check_branch
        %230 = sbr.rel (%p228) target = $region44
      $region43: #{autoencoder_forward.1} parent=39 // pred_region
        %s231 = smul.u32 4, %s13
        %p232 = scmp.lt.s32.totalorder %s231, 7
        %s233 = scalar_select %p232, %s231, 7
        %s234 = smul.addr %s233, 8
        %s235 = scalar_lea.vmem %s0, %s234
        %s236 = smul.u32 4, %s13
      $region44: #{autoencoder_forward.1} parent=39 // pred_fallthru
        _
    $region40: #{autoencoder_forward.1} parent=5 // pred_fallthru
      _
    %p237 = scmp.le.s32.totalorder 1, %s13
    %p238 = scmp.lt.s32.totalorder %s13, 3
    %p239 = pnand %p237, %p238
    %p240 = pneg %p239
    // Predicated region
    $region45: #{autoencoder_forward.1} parent=5 // pred_check
      _
    $region46: #{autoencoder_forward.1} parent=5 // pred_check_branch
      %242 = sbr.rel (%p239) target = $region48
    $region47: #{autoencoder_forward.1} parent=5 // pred_region
      %s243 = ssub.s32 %s13, 1
      %s244 = smul.u32 4, %s18
      %p245 = scmp.lt.s32.totalorder %s244, 7
      %s246 = scalar_select %p245, %s244, 7
      %s247 = smul.addr %s246, 8
      %s248 = scalar_lea.vmem %s0, %s247
      %p249 = pneg %p39
      %p250 = pneg %p36
      %p251 = pneg %p60
      %p252 = pneg %p57
      %p253 = pneg %p81
      %p254 = pneg %p78
      %p255 = pneg %p102
      %p256 = pneg %p99
      %p257 = pneg %p123
      %p258 = pneg %p120
      %p259 = pneg %p144
      %p260 = pneg %p141
      %p261 = pneg %p165
      %p262 = pneg %p162
      %p263 = pneg %p191
      %p264 = pneg %p188
      %s265 = smul.u32 4, %s18
      %p266 = scmp.lt.s32.totalorder %s265, 7
      %s267 = scalar_select %p266, %s265, 7
      %s268 = smul.addr %s267, 4
      %s269 = scalar_lea.vmem %s7, %s268
      %s270 = smul.u32 4, %s18
      %p271 = scmp.lt.s32.totalorder %s270, 7
      %s272 = scalar_select %p271, %s270, 7
      %s273 = smul.addr %s272, 8
      %s274 = scalar_lea.vmem %s0, %s273
      %s275 = smul.u32 4, %s18
      %s276 = smul.u32 4, %s18
      %p277 = scmp.lt.s32.totalorder %s276, 7
      %s278 = scalar_select %p277, %s276, 7
      %s279 = smul.addr %s278, 4
      %s280 = scalar_lea.vmem %s7, %s279
      %s281 = smul.u32 4, %s18
      %v283 = vld [vmem:[%s274] sm:$0xff]
      %v284 = vld [vmem:[%s274 + $0x8] sm:$0xff]
      %v285 = vld [vmem:[%s274 + $0x10] sm:$0xff]
      %v286 = vld [vmem:[%s274 + $0x18] sm:$0xff]
      %v287 = vpack.c.bf16 %v284, %v283
      %v288 = vpack.c.bf16 %v286, %v285
      %v289 = vld [vmem:[%s1] sm:$0xf]
      %v290 = vld [vmem:[%s1 + $0x4] sm:$0xf]
      %v291 = vld [vmem:[%s1 + $0x8] sm:$0xf]
      %v292 = vld [vmem:[%s1 + $0xc] sm:$0xf]
      %v293 = vld [vmem:[%s2] sm:$0x1]
      %v295 = vlaneseq
      %v296 = vshrl.u32 %v295, 7
      %v297 = vsub.s32 0, %v296
      %v298 = vrot.slane %v293, %v297
      %v304 = vunpack.c.l.b16 %v289
      %v305 = vunpack.c.l.b16 %v290
      %v306 = vunpack.c.l.b16 %v291
      %v307 = vunpack.c.l.b16 %v292
      %v308 = vpack.c.b16 %v305, %v304
      %v309 = vpack.c.b16 %v307, %v306
      %vm312 = vcmask 261120
      %v314 = vsel %vm312, %v287, 0
      %v317 = vsel %vm312, %v288, 0
      %319 = vmatprep.subr.bf16.mxu0 0
      %320 = vmatpush1.bf16.msra.mxu0 %v308
      %321 = vmatprep.subr.bf16.mxu0 0
      %322 = vmatpush1.bf16.msra.mxu0 %v309
      %323 = vmatprep.subr.bf16.mxu0 0
      %324 = vmatpush1.bf16.msra.mxu0 0
      %325 = vmatprep.subr.bf16.mxu0 0
      %326 = vmatpush1.bf16.msra.mxu0 0
      %327 = vmatprep.subr.bf16.mxu0 0
      %328 = vmatpush1.bf16.msra.mxu0 0
      %329 = vmatprep.subr.bf16.mxu0 0
      %330 = vmatpush1.bf16.msra.mxu0 0
      %331 = vmatprep.subr.bf16.mxu0 0
      %332 = vmatpush1.bf16.msra.mxu0 0
      %333 = vmatprep.subr.bf16.mxu0 0
      %334 = vmatpush1.bf16.msra.mxu0 0
      %335 = vmatprep.subr.bf16.mxu0 0
      %336 = vmatpush1.bf16.msra.mxu0 0
      %337 = vmatprep.subr.bf16.mxu0 0
      %338 = vmatpush1.bf16.msra.mxu0 0
      %339 = vmatprep.subr.bf16.mxu0 0
      %340 = vmatpush1.bf16.msra.mxu0 0
      %341 = vmatprep.subr.bf16.mxu0 0
      %342 = vmatpush1.bf16.msra.mxu0 0
      %343 = vmatprep.subr.bf16.mxu0 0
      %344 = vmatpush1.bf16.msra.mxu0 0
      %345 = vmatprep.subr.bf16.mxu0 0
      %346 = vmatpush1.bf16.msra.mxu0 0
      %347 = vmatprep.subr.bf16.mxu0 0
      %348 = vmatpush1.bf16.msra.mxu0 0
      %349 = vmatprep.subr.bf16.mxu0 0
      %350 = vmatpush1.bf16.msra.mxu0 0
      %351 = vmatprep.mubr.bf16.mxu0 0
      %352 = vmatmul.mubr.bf16.gmra.mrb[0].mxu0 %v314
      %v353 = vpop.f32.mrb[0].mxu0
      %v354 = vadd.f32 %v298, %v353
      %v355 = vpop.f32.mrb[0].mxu0
      %v356 = vpop.f32.mrb[0].mxu0
      %v357 = vadd.f32 %v298, %v356
      %v358 = vpop.f32.mrb[0].mxu0
      %359 = vmatprep.mubr.bf16.mxu0 0
      %360 = vmatmul.mubr.bf16.gmra.mrb[0].mxu0 %v317
      %v361 = vpop.f32.mrb[0].mxu0
      %v362 = vadd.f32 %v298, %v361
      %v363 = vpop.f32.mrb[0].mxu0
      %v364 = vpop.f32.mrb[0].mxu0
      %v365 = vadd.f32 %v298, %v364
      %v366 = vpop.f32.mrb[0].mxu0
      %367 = vdwg.mxu0
      %v368 = vmax.f32 %v354, 0.0
      %v369 = vmax.f32 %v357, 0.0
      %v370 = vmax.f32 %v362, 0.0
      %v371 = vmax.f32 %v365, 0.0
      %v372 = vpack.c.bf16 %v369, %v368
      %v373 = vpack.c.bf16 %v371, %v370
      %v374 = vld [vmem:[%s3] sm:$0xf]
      %v375 = vld [vmem:[%s3 + $0x4] sm:$0xf]
      %v376 = vld [vmem:[%s3 + $0x8] sm:$0xf]
      %v377 = vld [vmem:[%s3 + $0xc] sm:$0xf]
      %v378 = vld [vmem:[%s3 + $0x10] sm:$0xf]
      %v379 = vld [vmem:[%s3 + $0x14] sm:$0xf]
      %v380 = vld [vmem:[%s3 + $0x18] sm:$0xf]
      %v381 = vld [vmem:[%s3 + $0x1c] sm:$0xf]
      %v382 = vld [vmem:[%s3 + $0x20] sm:$0xf]
      %v383 = vld [vmem:[%s3 + $0x24] sm:$0xf]
      %v384 = vld [vmem:[%s3 + $0x28] sm:$0xf]
      %v385 = vld [vmem:[%s3 + $0x2c] sm:$0xf]
      %v386 = vld [vmem:[%s3 + $0x30] sm:$0xf]
      %v387 = vld [vmem:[%s3 + $0x34] sm:$0xf]
      %v388 = vld [vmem:[%s3 + $0x38] sm:$0xf]
      %v389 = vld [vmem:[%s3 + $0x3c] sm:$0xf]
      %v390 = vld [vmem:[%s4] sm:$0x1]
      %v392 = vlaneseq
      %v393 = vshrl.u32 %v392, 7
      %v394 = vsub.s32 0, %v393
      %v395 = vrot.slane %v390, %v394
      %v413 = vunpack.c.l.b16 %v374
      %v414 = vunpack.c.l.b16 %v375
      %v415 = vunpack.c.l.b16 %v376
      %v416 = vunpack.c.l.b16 %v377
      %v417 = vunpack.c.l.b16 %v378
      %v418 = vunpack.c.l.b16 %v379
      %v419 = vunpack.c.l.b16 %v380
      %v420 = vunpack.c.l.b16 %v381
      %v421 = vunpack.c.l.b16 %v382
      %v422 = vunpack.c.l.b16 %v383
      %v423 = vunpack.c.l.b16 %v384
      %v424 = vunpack.c.l.b16 %v385
      %v425 = vunpack.c.l.b16 %v386
      %v426 = vunpack.c.l.b16 %v387
      %v427 = vunpack.c.l.b16 %v388
      %v428 = vunpack.c.l.b16 %v389
      %v429 = vpack.c.b16 %v414, %v413
      %v430 = vpack.c.b16 %v416, %v415
      %v431 = vpack.c.b16 %v418, %v417
      %v432 = vpack.c.b16 %v420, %v419
      %v433 = vpack.c.b16 %v422, %v421
      %v434 = vpack.c.b16 %v424, %v423
      %v435 = vpack.c.b16 %v426, %v425
      %v436 = vpack.c.b16 %v428, %v427
      %445 = vmatprep.subr.bf16.mxu0 0
      %446 = vmatpush1.bf16.msra.mxu0 %v429
      %447 = vmatprep.subr.bf16.mxu0 0
      %448 = vmatpush1.bf16.msra.mxu0 %v430
      %449 = vmatprep.subr.bf16.mxu0 0
      %450 = vmatpush1.bf16.msra.mxu0 %v431
      %451 = vmatprep.subr.bf16.mxu0 0
      %452 = vmatpush1.bf16.msra.mxu0 %v432
      %453 = vmatprep.subr.bf16.mxu0 0
      %454 = vmatpush1.bf16.msra.mxu0 %v433
      %455 = vmatprep.subr.bf16.mxu0 0
      %456 = vmatpush1.bf16.msra.mxu0 %v434
      %457 = vmatprep.subr.bf16.mxu0 0
      %458 = vmatpush1.bf16.msra.mxu0 %v435
      %459 = vmatprep.subr.bf16.mxu0 0
      %460 = vmatpush1.bf16.msra.mxu0 %v436
      %461 = vmatprep.subr.bf16.mxu0 0
      %462 = vmatpush1.bf16.msra.mxu0 0
      %463 = vmatprep.subr.bf16.mxu0 0
      %464 = vmatpush1.bf16.msra.mxu0 0
      %465 = vmatprep.subr.bf16.mxu0 0
      %466 = vmatpush1.bf16.msra.mxu0 0
      %467 = vmatprep.subr.bf16.mxu0 0
      %468 = vmatpush1.bf16.msra.mxu0 0
      %469 = vmatprep.subr.bf16.mxu0 0
      %470 = vmatpush1.bf16.msra.mxu0 0
      %471 = vmatprep.subr.bf16.mxu0 0
      %472 = vmatpush1.bf16.msra.mxu0 0
      %473 = vmatprep.subr.bf16.mxu0 0
      %474 = vmatpush1.bf16.msra.mxu0 0
      %475 = vmatprep.subr.bf16.mxu0 0
      %476 = vmatpush1.bf16.msra.mxu0 0
      %477 = vmatprep.mubr.bf16.mxu0 0
      %478 = vmatmul.mubr.bf16.gmra.mrb[0].mxu0 %v372
      %v479 = vpop.f32.mrb[0].mxu0
      %v480 = vadd.f32 %v395, %v479
      %v481 = vpop.f32.mrb[0].mxu0
      %v482 = vpop.f32.mrb[0].mxu0
      %v483 = vadd.f32 %v395, %v482
      %v484 = vpop.f32.mrb[0].mxu0
      %485 = vmatprep.mubr.bf16.mxu0 0
      %486 = vmatmul.mubr.bf16.gmra.mrb[0].mxu0 %v373
      %v487 = vpop.f32.mrb[0].mxu0
      %v488 = vadd.f32 %v395, %v487
      %v489 = vpop.f32.mrb[0].mxu0
      %v490 = vpop.f32.mrb[0].mxu0
      %v491 = vadd.f32 %v395, %v490
      %v492 = vpop.f32.mrb[0].mxu0
      %493 = vdwg.mxu0
      %v494 = vmax.f32 %v480, 0.0
      %v495 = vmax.f32 %v483, 0.0
      %v496 = vmax.f32 %v488, 0.0
      %v497 = vmax.f32 %v491, 0.0
      %v498 = vpack.c.bf16 %v495, %v494
      %v499 = vpack.c.bf16 %v497, %v496
      %v500 = vld [vmem:[%s5] sm:$0xf]
      %v501 = vld [vmem:[%s5 + $0x4] sm:$0xf]
      %v502 = vld [vmem:[%s5 + $0x8] sm:$0xf]
      %v503 = vld [vmem:[%s5 + $0xc] sm:$0xf]
      %v504 = vld [vmem:[%s5 + $0x10] sm:$0xf]
      %v505 = vld [vmem:[%s5 + $0x14] sm:$0xf]
      %v506 = vld [vmem:[%s5 + $0x18] sm:$0xf]
      %v507 = vld [vmem:[%s5 + $0x1c] sm:$0xf]
      %v508 = vld [vmem:[%s5 + $0x20] sm:$0xf]
      %v509 = vld [vmem:[%s5 + $0x24] sm:$0xf]
      %v510 = vld [vmem:[%s5 + $0x28] sm:$0xf]
      %v511 = vld [vmem:[%s5 + $0x2c] sm:$0xf]
      %v512 = vld [vmem:[%s5 + $0x30] sm:$0xf]
      %v513 = vld [vmem:[%s5 + $0x34] sm:$0xf]
      %v514 = vld [vmem:[%s5 + $0x38] sm:$0xf]
      %v515 = vld [vmem:[%s5 + $0x3c] sm:$0xf]
      %v516 = vld [vmem:[%s6] sm:$0x1]
      %v518 = vlaneseq
      %v519 = vshrl.u32 %v518, 7
      %v520 = vsub.s32 0, %v519
      %v521 = vrot.slane %v516, %v520
      %v539 = vunpack.c.l.b16 %v500
      %v540 = vunpack.c.l.b16 %v501
      %v541 = vunpack.c.l.b16 %v502
      %v542 = vunpack.c.l.b16 %v503
      %v543 = vunpack.c.l.b16 %v504
      %v544 = vunpack.c.l.b16 %v505
      %v545 = vunpack.c.l.b16 %v506
      %v546 = vunpack.c.l.b16 %v507
      %v547 = vunpack.c.l.b16 %v508
      %v548 = vunpack.c.l.b16 %v509
      %v549 = vunpack.c.l.b16 %v510
      %v550 = vunpack.c.l.b16 %v511
      %v551 = vunpack.c.l.b16 %v512
      %v552 = vunpack.c.l.b16 %v513
      %v553 = vunpack.c.l.b16 %v514
      %v554 = vunpack.c.l.b16 %v515
      %v555 = vpack.c.b16 %v540, %v539
      %v556 = vpack.c.b16 %v542, %v541
      %v557 = vpack.c.b16 %v544, %v543
      %v558 = vpack.c.b16 %v546, %v545
      %v559 = vpack.c.b16 %v548, %v547
      %v560 = vpack.c.b16 %v550, %v549
      %v561 = vpack.c.b16 %v552, %v551
      %v562 = vpack.c.b16 %v554, %v553
      %571 = vmatprep.subr.bf16.mxu0 0
      %572 = vmatpush1.bf16.msra.mxu0 %v555
      %573 = vmatprep.subr.bf16.mxu0 0
      %574 = vmatpush1.bf16.msra.mxu0 %v556
      %575 = vmatprep.subr.bf16.mxu0 0
      %576 = vmatpush1.bf16.msra.mxu0 %v557
      %577 = vmatprep.subr.bf16.mxu0 0
      %578 = vmatpush1.bf16.msra.mxu0 %v558
      %579 = vmatprep.subr.bf16.mxu0 0
      %580 = vmatpush1.bf16.msra.mxu0 %v559
      %581 = vmatprep.subr.bf16.mxu0 0
      %582 = vmatpush1.bf16.msra.mxu0 %v560
      %583 = vmatprep.subr.bf16.mxu0 0
      %584 = vmatpush1.bf16.msra.mxu0 %v561
      %585 = vmatprep.subr.bf16.mxu0 0
      %586 = vmatpush1.bf16.msra.mxu0 %v562
      %587 = vmatprep.subr.bf16.mxu0 0
      %588 = vmatpush1.bf16.msra.mxu0 0
      %589 = vmatprep.subr.bf16.mxu0 0
      %590 = vmatpush1.bf16.msra.mxu0 0
      %591 = vmatprep.subr.bf16.mxu0 0
      %592 = vmatpush1.bf16.msra.mxu0 0
      %593 = vmatprep.subr.bf16.mxu0 0
      %594 = vmatpush1.bf16.msra.mxu0 0
      %595 = vmatprep.subr.bf16.mxu0 0
      %596 = vmatpush1.bf16.msra.mxu0 0
      %597 = vmatprep.subr.bf16.mxu0 0
      %598 = vmatpush1.bf16.msra.mxu0 0
      %599 = vmatprep.subr.bf16.mxu0 0
      %600 = vmatpush1.bf16.msra.mxu0 0
      %601 = vmatprep.subr.bf16.mxu0 0
      %602 = vmatpush1.bf16.msra.mxu0 0
      %603 = vmatprep.mubr.bf16.mxu0 0
      %604 = vmatmul.mubr.bf16.gmra.mrb[0].mxu0 %v498
      %v605 = vpop.f32.mrb[0].mxu0
      %v606 = vadd.f32 %v521, %v605
      %v607 = vpop.f32.mrb[0].mxu0
      %v608 = vpop.f32.mrb[0].mxu0
      %v609 = vadd.f32 %v521, %v608
      %v610 = vpop.f32.mrb[0].mxu0
      %611 = vmatprep.mubr.bf16.mxu0 0
      %612 = vmatmul.mubr.bf16.gmra.mrb[0].mxu0 %v499
      %v613 = vpop.f32.mrb[0].mxu0
      %v614 = vadd.f32 %v521, %v613
      %v615 = vpop.f32.mrb[0].mxu0
      %v616 = vpop.f32.mrb[0].mxu0
      %v617 = vadd.f32 %v521, %v616
      %v618 = vpop.f32.mrb[0].mxu0
      %619 = vdwg.mxu0
      %v620 = vtanh.pop %v606
      %v621 = vtanh.pop %v609
      %v622 = vtanh.pop %v614
      %v623 = vtanh.pop %v617
      %v624 = vpack.c.bf16 %v621, %v620
      %v625 = vpack.c.bf16 %v623, %v622
      %v628 = vunpack.c.l.b16 %v624
      %v629 = vunpack.c.h.b16 %v624
      %v630 = vunpack.c.l.b16 %v625
      %v631 = vunpack.c.h.b16 %v625
      %v632 = vpack.c.b16 %v628, %v628
      %v633 = vpack.c.b16 %v629, %v629
      %v634 = vpack.c.b16 %v630, %v630
      %v635 = vpack.c.b16 %v631, %v631
      %vm640 = vcmask 257024
      %641 = vst.msk [vmem:[%s280] sm:$0xf] %vm640, %v632
      %642 = vst.msk [vmem:[%s280 + $0x4] sm:$0xf] %vm640, %v633
      %643 = vst.msk [vmem:[%s280 + $0x8] sm:$0xf] %vm640, %v634
      %644 = vst.msk [vmem:[%s280 + $0xc] sm:$0xf] %vm640, %v635
      %s645 = smul.u32 4, %s18
      %p646 = scmp.lt.s32.totalorder %s645, 7
      %s647 = scalar_select %p646, %s645, 7
      %s648 = smul.addr %s647, 4
      %s649 = scalar_lea.vmem %s7, %s648
      // Predicated region
      $region49: #{autoencoder_forward.1} parent=47 // pred_check
        %p650 = pneg %p188
      $region50: #{autoencoder_forward.1} parent=47 // pred_check_branch
        %652 = sbr.rel (%p650) target = $region52
      $region51: #{autoencoder_forward.1} parent=47 // pred_region
        %s653 = smul.u32 4, %s18
      $region52: #{autoencoder_forward.1} parent=47 // pred_fallthru
        _
    $region48: #{autoencoder_forward.1} parent=5 // pred_fallthru
      _
    %p654 = scmp.le.s32.totalorder 2, %s13
    // Predicated region
    $region53: #{autoencoder_forward.1} parent=5 // pred_check
      %p655 = pneg %p654
    $region54: #{autoencoder_forward.1} parent=5 // pred_check_branch
      %657 = sbr.rel (%p655) target = $region56
    $region55: #{autoencoder_forward.1} parent=5 // pred_region
      %s658 = ssub.s32 %s13, 2
      // Predicated region
      $region57: #{autoencoder_forward.1} parent=55 // pred_check
        %p659 = pneg %p194
      $region58: #{autoencoder_forward.1} parent=55 // pred_check_branch
        %661 = sbr.rel (%p659) target = $region60
      $region59: #{autoencoder_forward.1} parent=55 // pred_region
        %s662 = smul.u32 4, %s19
        %p663 = scmp.lt.s32.totalorder %s662, 7
        %s664 = scalar_select %p663, %s662, 7
        %s665 = smul.addr %s664, 4
        %s666 = scalar_lea.vmem %s7, %s665
      $region60: #{autoencoder_forward.1} parent=55 // pred_fallthru
        _
    $region56: #{autoencoder_forward.1} parent=5 // pred_fallthru
      _
  $region6: #{autoencoder_forward.1} parent=0 // loop_footer
    %s17 = sadd.s32 1, %s13
  $region7: #{autoencoder_forward.1} parent=0 // loop_footer_branch
    %12 = sbr.rel target = $region3
  $region8: #{autoencoder_forward.1} parent=0 // loop_exit
    _

</llo_original>
